<compile_context>
chip_gen: v5e
topology: v5e:2x2
jax: 0.10.0
libtpu: 0.0.40
codegen_flags: <defaults>
</compile_context>

<pallas_src>
import functools

import jax
import jax.numpy as jnp
from jax.experimental import pallas as pl
from jax.experimental.pallas import tpu as pltpu


def _round_up(x, m):
    return ((x + m - 1) // m) * m


def _spatial_gather_kernel(probs_ref, feats_ref, out_ref,
                           m_ref, s_ref, acc_ref, *, scale, n_valid, tn, ragged):
    # probs_ref: (1, K, TN)   feats_ref: (1, CB, TN)   out_ref: (1, K, CB)
    # m_ref/s_ref: (K, 1) f32 running max / running sum
    # acc_ref:     (K, CB) f32 unnormalized context accumulator
    n_step = pl.program_id(2)

    @pl.when(n_step == 0)
    def _init():
        m_ref[...] = jnp.full(m_ref.shape, -jnp.inf, jnp.float32)
        s_ref[...] = jnp.zeros_like(s_ref)
        acc_ref[...] = jnp.zeros_like(acc_ref)

    p = probs_ref[0].astype(jnp.float32)                       # (K, TN)
    if scale != 1.0:                                           # static check
        p = p * scale
    f = feats_ref[0]                                           # (CB, TN)

    if ragged:
        # Last tile may read past N: mask logits to -inf (weight -> 0) and the
        # feats columns to 0 so OOB garbage (NaN/Inf) cannot poison the MXU.
        col = n_step * tn + jax.lax.broadcasted_iota(jnp.int32, (1, tn), 1)
        valid = col < n_valid                                  # (1, TN)
        p = jnp.where(valid, p, -jnp.inf)
        f = jnp.where(valid, f, jnp.zeros_like(f))

    # Online-softmax update; unnormalized exp weights feed the MXU.
    m_prev = m_ref[...]                                        # (K, 1)
    m_new = jnp.maximum(m_prev, jnp.max(p, axis=-1, keepdims=True))
    alpha = jnp.exp(m_prev - m_new)                            # (K, 1)
    e = jnp.exp(p - m_new)                                     # (K, TN)
    s_ref[...] = alpha * s_ref[...] + jnp.sum(e, axis=-1, keepdims=True)
    m_ref[...] = m_new

    # (K, TN) x (CB, TN) contracted over the spatial axis -> (K, CB).
    part = jax.lax.dot_general(
        e.astype(f.dtype), f,
        dimension_numbers=(((1,), (1,)), ((), ())),
        preferred_element_type=jnp.float32)                    # (K, CB)
    acc_ref[...] = acc_ref[...] * alpha + part

    @pl.when(n_step == pl.num_programs(2) - 1)
    def _finalize():
        out_ref[0] = (acc_ref[...] * (1.0 / s_ref[...])).astype(out_ref.dtype)


def spatial_gather(feats, probs, scale=1.0, tn=None, c_blocks=None):
    """feats: (B, C, H, W), probs: (B, K, H, W) -> (B, C, K, 1), matching PyTorch."""
    B, C, H, W = feats.shape
    Bp, K, Hp, Wp = probs.shape
    assert (Bp, Hp, Wp) == (B, H, W)
    N = H * W

    probs_flat = probs.reshape(B, K, N)      # native layouts: no transpose, no pad
    feats_flat = feats.reshape(B, C, N)

    felt = jnp.dtype(feats.dtype).itemsize
    pelt = jnp.dtype(probs.dtype).itemsize

    # ---- hardware-aware knobs ------------------------------------------------
    try:
        vmem_cap = int(pltpu.get_tpu_info().vmem_capacity_bytes)
    except Exception:  # conservative fallback if the query is unavailable
        vmem_cap = 128 << 20
    small_vmem = vmem_cap <= (64 << 20)       # v7x-like: 64 MiB/TC, fastest HBM
    tile_target = (8 << 20) if small_vmem else (4 << 20)
    tn_cap = 8192 if small_vmem else 4096

    # Split C across a parallel grid axis only when batch alone cannot keep two
    # TensorCores busy; each C-block recomputes the cheap (K, TN) softmax stats.
    # C_BLK must stay a multiple of 128 (lane-dense output block).
    if c_blocks is None:
        c_blocks = 2 if (B == 1 and C % 256 == 0) else 1
    assert C % c_blocks == 0
    cb = C // c_blocks
    assert cb == C or cb % 128 == 0

    if N >= 128:
        if tn is None:
            target = tile_target // max(1, _round_up(cb, 8) * felt)
            tn = (target // 128) * 128
        tn = max(128, min((int(tn) // 128) * 128, tn_cap, (N // 128) * 128))
    else:
        # Spatial extent smaller than one lane group: single full-extent tile.
        tn = N
    n_tiles = pl.cdiv(N, tn)
    ragged = (N % tn) != 0

    # ---- VMEM budget (lane/sublane padded, double-buffered) -------------------
    k_pad = _round_up(K, 8)
    cb_lanes = _round_up(cb, 128)
    tn_lanes = _round_up(tn, 128)
    in_bytes = 2 * (k_pad * tn_lanes * pelt + _round_up(cb, 8) * tn_lanes * felt)
    out_bytes = 2 * k_pad * cb_lanes * felt
    state_bytes = k_pad * cb_lanes * 4 + 2 * k_pad * 128 * 4
    vmem_need = in_bytes + out_bytes + state_bytes
    vmem_limit = int(min(int(0.75 * vmem_cap), max(32 << 20, 2 * vmem_need)))

    kernel = functools.partial(_spatial_gather_kernel, scale=float(scale),
                               n_valid=N, tn=tn, ragged=ragged)

    ctx = pl.pallas_call(
        kernel,
        out_shape=jax.ShapeDtypeStruct((B, K, C), feats.dtype),
        grid_spec=pltpu.PrefetchScalarGridSpec(
            num_scalar_prefetch=0,
            grid=(B, c_blocks, n_tiles),            # reduction (N) axis last
            in_specs=[
                pl.BlockSpec((1, K, tn), lambda b, c, n: (b, 0, n)),
                pl.BlockSpec((1, cb, tn), lambda b, c, n: (b, c, n)),
            ],
            out_specs=pl.BlockSpec((1, K, cb), lambda b, c, n: (b, 0, c)),
            scratch_shapes=[
                pltpu.VMEM((K, 1), jnp.float32),     # running max
                pltpu.VMEM((K, 1), jnp.float32),     # running sum
                pltpu.VMEM((K, cb), jnp.float32),    # context accumulator
            ],
        ),
        compiler_params=pltpu.CompilerParams(
            dimension_semantics=("parallel", "parallel", "arbitrary"),
            vmem_limit_bytes=vmem_limit,
        ),
    )(probs_flat, feats_flat)                        # (B, K, C)

    # Tiny (B*K*C element) layout fixup outside the kernel.
    return jnp.transpose(ctx, (0, 2, 1))[..., None]  # (B, C, K, 1)


def _reference(feats, probs, scale=1.0):
    B, C, H, W = feats.shape
    K = probs.shape[1]
    p = probs.reshape(B, K, -1)
    f = jnp.transpose(feats.reshape(B, C, -1), (0, 2, 1))
    p = jax.nn.softmax(scale * p, axis=2)
    ctx = jnp.einsum("bkn,bnc->bkc", p, f)
    return jnp.transpose(ctx, (0, 2, 1))[..., None]


if __name__ == "__main__":
    key = jax.random.PRNGKey(0)
    k1, k2, k3, k4, k5, k6 = jax.random.split(key, 6)

    # Case 1: even tiling; tn=128 forces 2 N-tiles so the online-softmax
    # accumulation path is exercised.
    B, C, K, H, W = 2, 32, 4, 16, 16
    feats = jax.random.normal(k1, (B, C, H, W), dtype=jnp.float32)
    probs = jax.random.normal(k2, (B, K, H, W), dtype=jnp.float32)
    out = spatial_gather(feats, probs, scale=1.0, tn=128)
    jax.block_until_ready(out)
    ref = _reference(feats, probs, scale=1.0)
    assert out.shape == (B, C, K, 1), out.shape
    assert jnp.allclose(out, ref, atol=1e-3, rtol=1e-3), "mismatch (case 1)"

    # Case 2: N < 128 -> single full-extent (non-128-multiple) tile, scale != 1.
    B2, C2, K2, H2, W2 = 1, 16, 3, 10, 10
    feats2 = jax.random.normal(k3, (B2, C2, H2, W2), dtype=jnp.float32)
    probs2 = jax.random.normal(k4, (B2, K2, H2, W2), dtype=jnp.float32)
    out2 = spatial_gather(feats2, probs2, scale=2.0)
    jax.block_until_ready(out2)
    ref2 = _reference(feats2, probs2, scale=2.0)
    assert out2.shape == (B2, C2, K2, 1), out2.shape
    assert jnp.allclose(out2, ref2, atol=1e-3, rtol=1e-3), "mismatch (case 2)"

    # Case 3: ragged last N-tile (in-kernel masking), C-block split (B=1),
    # plus a scale=0 check (uniform softmax; masked columns must get 0 weight).
    B3, C3, K3, H3, W3 = 1, 256, 5, 16, 12
    feats3 = jax.random.normal(k5, (B3, C3, H3, W3), dtype=jnp.float32)
    probs3 = jax.random.normal(k6, (B3, K3, H3, W3), dtype=jnp.float32)
    out3 = spatial_gather(feats3, probs3, scale=0.5)
    jax.block_until_ready(out3)
    ref3 = _reference(feats3, probs3, scale=0.5)
    assert out3.shape == (B3, C3, K3, 1), out3.shape
    assert jnp.allclose(out3, ref3, atol=1e-3, rtol=1e-3), "mismatch (case 3)"

    out4 = spatial_gather(feats3, probs3, scale=0.0)
    jax.block_until_ready(out4)
    ref4 = _reference(feats3, probs3, scale=0.0)
    assert jnp.allclose(out4, ref4, atol=1e-3, rtol=1e-3), "mismatch (scale=0)"

    print("KERNEL_OK")
</pallas_src>

<mosaic_0001>
module attributes {stable_mosaic.version = 11 : i64} {
  func.func @_spatial_gather_kernel(%arg0: i32, %arg1: i32, %arg2: i32, %arg3: memref<1x4x128xf32, #tpu.memory_space<vmem>>, %arg4: memref<1x32x128xf32, #tpu.memory_space<vmem>>, %arg5: memref<1x4x32xf32, #tpu.memory_space<vmem>>, %arg6: memref<4x1xf32, #tpu.memory_space<vmem>>, %arg7: memref<4x1xf32, #tpu.memory_space<vmem>>, %arg8: memref<4x32xf32, #tpu.memory_space<vmem>>) attributes {dimension_semantics = [#tpu.dimension_semantics<parallel>, #tpu.dimension_semantics<parallel>, #tpu.dimension_semantics<arbitrary>], iteration_bounds = array<i64: 2, 1, 2>, scalar_prefetch = 0 : i64, scratch_operands = 3 : i64, tpu.core_type = #tpu.core_type<tc>, window_params = [{transform_indices = @transform_0, window_bounds = array<i64: 1, 4, 128>}, {transform_indices = @transform_1, window_bounds = array<i64: 1, 32, 128>}, {transform_indices = @transform_2, window_bounds = array<i64: 1, 4, 32>}]} {
    %c0_i32 = arith.constant 0 : i32
    %0 = arith.cmpi eq, %arg2, %c0_i32 : i32
    %1 = arith.extui %0 : i1 to i32
    %c0_i32_0 = arith.constant 0 : i32
    %2 = arith.cmpi ne, %1, %c0_i32_0 : i32
    scf.if %2 {
      %cst_21 = arith.constant 0xFF800000 : f32
      %32 = vector.broadcast %cst_21 : f32 to vector<4x1xf32>
      %c0_22 = arith.constant 0 : index
      %c0_23 = arith.constant 0 : index
      %33 = vector.load %arg6[%c0_22, %c0_23] : memref<4x1xf32, #tpu.memory_space<vmem>>, vector<4x1xf32>
      tpu.vector_store %arg6[%c0_22, %c0_23], %32 {strides = array<i32>} : memref<4x1xf32, #tpu.memory_space<vmem>>, vector<4x1xf32>,
      %cst_24 = arith.constant 0.000000e+00 : f32
      %34 = vector.broadcast %cst_24 : f32 to vector<4x1xf32>
      %c0_25 = arith.constant 0 : index
      %c0_26 = arith.constant 0 : index
      %35 = vector.load %arg7[%c0_25, %c0_26] : memref<4x1xf32, #tpu.memory_space<vmem>>, vector<4x1xf32>
      tpu.vector_store %arg7[%c0_25, %c0_26], %34 {strides = array<i32>} : memref<4x1xf32, #tpu.memory_space<vmem>>, vector<4x1xf32>,
      %cst_27 = arith.constant 0.000000e+00 : f32
      %36 = vector.broadcast %cst_27 : f32 to vector<4x32xf32>
      %c0_28 = arith.constant 0 : index
      %c0_29 = arith.constant 0 : index
      %37 = vector.load %arg8[%c0_28, %c0_29] : memref<4x32xf32, #tpu.memory_space<vmem>>, vector<4x32xf32>
      tpu.vector_store %arg8[%c0_28, %c0_29], %36 {strides = array<i32>} : memref<4x32xf32, #tpu.memory_space<vmem>>, vector<4x32xf32>,
    } else {
    }
    %c0 = arith.constant 0 : index
    %c0_1 = arith.constant 0 : index
    %c0_2 = arith.constant 0 : index
    %3 = vector.load %arg3[%c0, %c0_1, %c0_2] : memref<1x4x128xf32, #tpu.memory_space<vmem>>, vector<1x4x128xf32>
    %4 = vector.shape_cast %3 : vector<1x4x128xf32> to vector<4x128xf32>
    %c0_3 = arith.constant 0 : index
    %c0_4 = arith.constant 0 : index
    %c0_5 = arith.constant 0 : index
    %5 = vector.load %arg4[%c0_3, %c0_4, %c0_5] : memref<1x32x128xf32, #tpu.memory_space<vmem>>, vector<1x32x128xf32>
    %6 = vector.shape_cast %5 : vector<1x32x128xf32> to vector<32x128xf32>
    %c0_6 = arith.constant 0 : index
    %c0_7 = arith.constant 0 : index
    %7 = vector.load %arg6[%c0_6, %c0_7] : memref<4x1xf32, #tpu.memory_space<vmem>>, vector<4x1xf32>
    %cst = arith.constant dense<0xFF800000> : vector<4xf32>
    %8 = vector.multi_reduction <maximumf>, %4, %cst [1] : vector<4x128xf32> to vector<4xf32>
    %9 = vector.shape_cast %8 : vector<4xf32> to vector<4x1xf32>
    %10 = arith.maximumf %7, %9 : vector<4x1xf32>
    %11 = arith.subf %7, %10 : vector<4x1xf32>
    %12 = math.exp %11 : vector<4x1xf32>
    %13 = vector.broadcast %10 : vector<4x1xf32> to vector<4x128xf32>
    %14 = arith.subf %4, %13 : vector<4x128xf32>
    %15 = math.exp %14 : vector<4x128xf32>
    %c0_8 = arith.constant 0 : index
    %c0_9 = arith.constant 0 : index
    %16 = vector.load %arg7[%c0_8, %c0_9] : memref<4x1xf32, #tpu.memory_space<vmem>>, vector<4x1xf32>
    %17 = arith.mulf %12, %16 : vector<4x1xf32>
    %cst_10 = arith.constant dense<0.000000e+00> : vector<4xf32>
    %18 = vector.multi_reduction <add>, %15, %cst_10 [1] : vector<4x128xf32> to vector<4xf32>
    %19 = vector.shape_cast %18 : vector<4xf32> to vector<4x1xf32>
    %20 = arith.addf %17, %19 : vector<4x1xf32>
    %c0_11 = arith.constant 0 : index
    %c0_12 = arith.constant 0 : index
    %21 = vector.load %arg7[%c0_11, %c0_12] : memref<4x1xf32, #tpu.memory_space<vmem>>, vector<4x1xf32>
    tpu.vector_store %arg7[%c0_11, %c0_12], %20 {strides = array<i32>} : memref<4x1xf32, #tpu.memory_space<vmem>>, vector<4x1xf32>,
    %c0_13 = arith.constant 0 : index
    %c0_14 = arith.constant 0 : index
    %22 = vector.load %arg6[%c0_13, %c0_14] : memref<4x1xf32, #tpu.memory_space<vmem>>, vector<4x1xf32>
    tpu.vector_store %arg6[%c0_13, %c0_14], %10 {strides = array<i32>} : memref<4x1xf32, #tpu.memory_space<vmem>>, vector<4x1xf32>,
    %cst_15 = arith.constant dense<0.000000e+00> : vector<4x32xf32>
    %23 = tpu.matmul %15, %6, %cst_15 {dimension_numbers = #tpu.dot_dimension_numbers<[1], [1], [0], [0], [0, 0, 1, 0], [], []>} : vector<4x128xf32>, vector<32x128xf32>, vector<4x32xf32> -> vector<4x32xf32>
    %c0_16 = arith.constant 0 : index
    %c0_17 = arith.constant 0 : index
    %24 = vector.load %arg8[%c0_16, %c0_17] : memref<4x32xf32, #tpu.memory_space<vmem>>, vector<4x32xf32>
    %25 = vector.broadcast %12 : vector<4x1xf32> to vector<4x32xf32>
    %26 = arith.mulf %24, %25 : vector<4x32xf32>
    %27 = arith.addf %26, %23 : vector<4x32xf32>
    %c0_18 = arith.constant 0 : index
    %c0_19 = arith.constant 0 : index
    %28 = vector.load %arg8[%c0_18, %c0_19] : memref<4x32xf32, #tpu.memory_space<vmem>>, vector<4x32xf32>
    tpu.vector_store %arg8[%c0_18, %c0_19], %27 {strides = array<i32>} : memref<4x32xf32, #tpu.memory_space<vmem>>, vector<4x32xf32>,
    %c1_i32 = arith.constant 1 : i32
    %29 = arith.cmpi eq, %arg2, %c1_i32 : i32
    %30 = arith.extui %29 : i1 to i32
    %c0_i32_20 = arith.constant 0 : i32
    %31 = arith.cmpi ne, %30, %c0_i32_20 : i32
    scf.if %31 {
      %c0_21 = arith.constant 0 : index
      %c0_22 = arith.constant 0 : index
      %32 = vector.load %arg8[%c0_21, %c0_22] : memref<4x32xf32, #tpu.memory_space<vmem>>, vector<4x32xf32>
      %c0_23 = arith.constant 0 : index
      %c0_24 = arith.constant 0 : index
      %33 = vector.load %arg7[%c0_23, %c0_24] : memref<4x1xf32, #tpu.memory_space<vmem>>, vector<4x1xf32>
      %cst_25 = arith.constant 1.000000e+00 : f32
      %34 = vector.broadcast %cst_25 : f32 to vector<4x1xf32>
      %35 = arith.divf %34, %33 : vector<4x1xf32>
      %36 = vector.broadcast %35 : vector<4x1xf32> to vector<4x32xf32>
      %37 = arith.mulf %32, %36 : vector<4x32xf32>
      %c0_26 = arith.constant 0 : index
      %c0_27 = arith.constant 0 : index
      %c0_28 = arith.constant 0 : index
      %38 = vector.load %arg5[%c0_26, %c0_27, %c0_28] : memref<1x4x32xf32, #tpu.memory_space<vmem>>, vector<1x4x32xf32>
      %39 = vector.shape_cast %38 : vector<1x4x32xf32> to vector<4x32xf32>
      %40 = vector.shape_cast %37 : vector<4x32xf32> to vector<1x4x32xf32>
      tpu.vector_store %arg5[%c0_26, %c0_27, %c0_28], %40 {strides = array<i32>} : memref<1x4x32xf32, #tpu.memory_space<vmem>>, vector<1x4x32xf32>,
    } else {
    }
    return
  }
  func.func @transform_0(%arg0: i32, %arg1: i32, %arg2: i32) -> (i32, i32, i32) {
    %c0_i32 = arith.constant 0 : i32
    %c0_i32_0 = arith.constant 0 : i32
    return %arg0, %c0_i32, %arg2 : i32, i32, i32
  }
  func.func @transform_1(%arg0: i32, %arg1: i32, %arg2: i32) -> (i32, i32, i32) {
    %c0_i32 = arith.constant 0 : i32
    return %arg0, %arg1, %arg2 : i32, i32, i32
  }
  func.func @transform_2(%arg0: i32, %arg1: i32, %arg2: i32) -> (i32, i32, i32) {
    %c0_i32 = arith.constant 0 : i32
    %c0_i32_0 = arith.constant 0 : i32
    return %arg0, %c0_i32, %arg1 : i32, i32, i32
  }
}

</mosaic_0001>

<llo_original>
// kernel: tpu_custom_call.1
$region0: #{tpu_custom_call.1}
  #allocation0 [shape = 'u32[]', space=smem, size = 0x4, offset = 0x4, fixed_abs, tag = 'smem constant byte address 0x4 - core index']
  #allocation1 [shape = 'u32[72,128]{1,0:T(1,128)}', space=vmem, size = 0x9000, scoped, tag = 'internal scratch']
  #allocation2 [shape = 'f32[4,1]{1,0:T(4,128)}', space=vmem, size = 0x800, scoped, tag = 'scratch operand']
  #allocation3 [shape = 'f32[4,1]{1,0:T(4,128)}', space=vmem, size = 0x800, scoped, tag = 'scratch operand']
  #allocation4 [shape = 'f32[4,32]{1,0:T(4,128)}', space=vmem, size = 0x800, scoped, tag = 'scratch operand']
  %s0 = inlined_call_operand.hbm [shape: f32[2,4,256], index: 0, kind: input, shape index: {}]
  %s1 = inlined_call_operand.hbm [shape: f32[2,32,256], index: 1, kind: input, shape index: {}]
  %s2 = inlined_call_operand.hbm [shape: f32[2,4,32], index: 2, kind: output, shape index: {}]
  %s3 = sld [smem:[#allocation0]]
  $region57: #{tpu_custom_call.1} parent=0
    _
  %s5 = ssub.s32 1, %s3
  %s6 = scalar_select 0, %s5, %s3
  $region1: #{tpu_custom_call.1} parent=0
    #allocation5 [shape = 'u8[4096]{0}', space=vmem, size = 0x1000, scoped, tag = 'input window, operand 0']
    #allocation6 [shape = 's32[2]{0}', space=sflag, size = 0x8, scoped, tag = 'scoped memory for tpu_custom_call.1']
    #allocation7 [shape = 's32[2]{0}', space=sflag, size = 0x8, scoped, tag = 'scoped memory for tpu_custom_call.1']
    #allocation8 [shape = 'u8[32768]{0}', space=vmem, size = 0x8000, scoped, tag = 'input window, operand 1']
    #allocation9 [shape = 's32[2]{0}', space=sflag, size = 0x8, scoped, tag = 'scoped memory for tpu_custom_call.1']
    #allocation10 [shape = 'u8[4096]{0}', space=vmem, size = 0x1000, scoped, tag = 'output window, operand 0']
    %7 = vsyncpa [#allocation6], 0
    %s8 = scalar_lea.sflag [#allocation6], 1
    %9 = vsyncpa %s8, 0
    %10 = vsyncpa [#allocation9], 0
    %s11 = scalar_lea.sflag [#allocation9], 1
    %12 = vsyncpa %s11, 0
    %13 = vsyncpa [#allocation7], 0
    %s14 = scalar_lea.sflag [#allocation7], 1
    %15 = vsyncpa %s14, 0
    loop: start=0, step=1, limit=6
    $region2: #{tpu_custom_call.1} parent=1 // loop_pre_header
      _
    $region3: #{tpu_custom_call.1} parent=1 // loop_header
      %s17 = sphi 0, %s21
      %p18 = scmp.ge.s32.totalorder %s17, 6
      %s24 = sphi 0, %s43
      %s25 = sphi 0, %s39
      %s26 = sphi 0, %s35
      %s27 = sphi 0, %s24
      %s28 = sphi 0, %s25
      %s29 = sphi 0, %s26
      %s30 = sphi 0, %s27
      %s31 = sphi 0, %s28
      %s32 = sphi 0, %s29
      %s48 = sphi 0, %s50
      %s51 = sphi 0, %s48
      %s52 = sphi 0, %s51
      %s68 = sphi 0, %s52
      %s78 = sphi 0, %s80
      %s81 = sphi 0, %s78
      %s82 = sphi 0, %s81
      %s98 = sphi 0, %s82
      %s106 = sphi 0, %s108
      %s109 = sphi 0, %s106
      %s110 = sphi 0, %s109
      %s126 = sphi 0, %s110
    $region4: #{tpu_custom_call.1} parent=1 // loop_header_branch
      %20 = sbr.rel (%p18) target = $region8
    $region5: #{tpu_custom_call.1} parent=1 // loop_body
      %s22 = ssub.s32 %s17, 1
      %s23 = ssub.s32 %s17, 2
      %s33 = sadd.s32 1, %s26
      %p34 = scmp.ge.s32.totalorder %s33, 2
      %s35 = scalar_select %p34, 0, %s33
      %s36 = sadd.s32 1, %s25
      %s37 = scalar_select %p34, %s36, %s25
      %p38 = scmp.ge.s32.totalorder %s37, 1
      %s39 = scalar_select %p38, 0, %s37
      %s40 = sadd.s32 1, %s24
      %s41 = scalar_select %p38, %s40, %s24
      %p42 = scmp.ge.s32.totalorder %s41, 2
      %s43 = scalar_select %p42, 0, %s41
      %s44 = ssub.s32 %s24, %s43
      %s45 = ssub.s32 %s26, %s35
      %s46 = sor.u32 %s44, %s45
      %p47 = scmp.eq.s32.totalorder %s46, 0
      %s49 = sadd.s32 %s48, 1
      %s50 = scalar_select %p47, %s48, %s49
      %p53 = pneg %p47
      %p54 = scmp.eq.s32.totalorder %s17, 3
      %p55 = por %p53, %p54
      %p56 = scmp.ne.s32.totalorder %s48, %s51
      %p57 = scmp.eq.s32.totalorder %s17, 0
      %p58 = por %p56, %p57
      %p59 = scmp.ne.s32.totalorder %s48, %s51
      %p60 = scmp.eq.s32.totalorder %s22, 3
      %p61 = por %p59, %p60
      %p62 = scmp.ne.s32.totalorder %s51, %s52
      %p63 = scmp.eq.s32.totalorder %s22, 0
      %p64 = por %p62, %p63
      %p65 = scmp.ne.s32.totalorder %s51, %s52
      %p66 = scmp.eq.s32.totalorder %s23, 3
      %p67 = por %p65, %p66
      %p69 = scmp.ne.s32.totalorder %s52, %s68
      %p70 = scmp.eq.s32.totalorder %s23, 0
      %p71 = por %p69, %p70
      %s72 = ssub.s32 %s24, %s43
      %s73 = ssub.s32 %s25, %s39
      %s74 = sor.u32 %s72, %s73
      %s75 = ssub.s32 %s26, %s35
      %s76 = sor.u32 %s74, %s75
      %p77 = scmp.eq.s32.totalorder %s76, 0
      %s79 = sadd.s32 %s78, 1
      %s80 = scalar_select %p77, %s78, %s79
      %p83 = pneg %p77
      %p84 = scmp.eq.s32.totalorder %s17, 3
      %p85 = por %p83, %p84
      %p86 = scmp.ne.s32.totalorder %s78, %s81
      %p87 = scmp.eq.s32.totalorder %s17, 0
      %p88 = por %p86, %p87
      %p89 = scmp.ne.s32.totalorder %s78, %s81
      %p90 = scmp.eq.s32.totalorder %s22, 3
      %p91 = por %p89, %p90
      %p92 = scmp.ne.s32.totalorder %s81, %s82
      %p93 = scmp.eq.s32.totalorder %s22, 0
      %p94 = por %p92, %p93
      %p95 = scmp.ne.s32.totalorder %s81, %s82
      %p96 = scmp.eq.s32.totalorder %s23, 3
      %p97 = por %p95, %p96
      %p99 = scmp.ne.s32.totalorder %s82, %s98
      %p100 = scmp.eq.s32.totalorder %s23, 0
      %p101 = por %p99, %p100
      %s102 = ssub.s32 %s24, %s43
      %s103 = ssub.s32 %s25, %s39
      %s104 = sor.u32 %s102, %s103
      %p105 = scmp.eq.s32.totalorder %s104, 0
      %s107 = sadd.s32 %s106, 1
      %s108 = scalar_select %p105, %s106, %s107
      %p111 = pneg %p105
      %p112 = scmp.eq.s32.totalorder %s17, 3
      %p113 = por %p111, %p112
      %p114 = scmp.ne.s32.totalorder %s106, %s109
      %p115 = scmp.eq.s32.totalorder %s17, 0
      %p116 = por %p114, %p115
      %p117 = scmp.ne.s32.totalorder %s106, %s109
      %p118 = scmp.eq.s32.totalorder %s22, 3
      %p119 = por %p117, %p118
      %p120 = scmp.ne.s32.totalorder %s109, %s110
      %p121 = scmp.eq.s32.totalorder %s22, 0
      %p122 = por %p120, %p121
      %p123 = scmp.ne.s32.totalorder %s109, %s110
      %p124 = scmp.eq.s32.totalorder %s23, 3
      %p125 = por %p123, %p124
      %p127 = scmp.ne.s32.totalorder %s110, %s126
      %p128 = scmp.eq.s32.totalorder %s23, 0
      %p129 = por %p127, %p128
      %p130 = scmp.le.s32.totalorder 1, %s17
      %p131 = scmp.lt.s32.totalorder %s17, 5
      %p132 = pnand %p130, %p131
      %p133 = pneg %p132
      // Predicated region
      $region9: #{tpu_custom_call.1} parent=5 // pred_check
        _
      $region10: #{tpu_custom_call.1} parent=5 // pred_check_branch
        %135 = sbr.rel (%p132) target = $region12
      $region11: #{tpu_custom_call.1} parent=5 // pred_region
        %s136 = ssub.s32 %s17, 1
      $region12: #{tpu_custom_call.1} parent=5 // pred_fallthru
        _
      %p137 = scmp.lt.s32.totalorder %s17, 4
      // Predicated region
      $region13: #{tpu_custom_call.1} parent=5 // pred_check
        %p138 = pneg %p137
      $region14: #{tpu_custom_call.1} parent=5 // pred_check_branch
        %140 = sbr.rel (%p138) target = $region16
      $region15: #{tpu_custom_call.1} parent=5 // pred_region
        // Predicated region
        $region17: #{tpu_custom_call.1} parent=15 // pred_check
          %p141 = pneg %p58
        $region18: #{tpu_custom_call.1} parent=15 // pred_check_branch
          %143 = sbr.rel (%p141) target = $region20
        $region19: #{tpu_custom_call.1} parent=15 // pred_region
          %s144 = sand.u32 %s48, 1
          %s145 = scalar_lea.sflag [#allocation6], %s144
          %s146 = sand.u32 %s48, 1
          %s147 = smul.addr %s146, 4
          %s148 = scalar_lea.vmem [#allocation5], %s147
          %150 = vsyncadd %s145, 0
          %s151 = smul.addr %s24, 2
          %s152 = sadd.s32 %s26, %s151
          %s153 = smul.addr %s152, 4
          %s154 = scalar_lea.hbm %s0, %s153
          %s156 = sshll.u32 %s154, 4
          %s157 = int_to_ptr.hbm [resolvable:$true] %s156
          %s158 = sshll.u32 %s148, 4
          %s159 = int_to_ptr.vmem [resolvable:$true] %s158
          %161 = dma.hbm_to_vmem [thread:$0]  %s157, 64, %s159, %s145
        $region20: #{tpu_custom_call.1} parent=15 // pred_fallthru
          _
        // Predicated region
        $region21: #{tpu_custom_call.1} parent=15 // pred_check
          %p162 = pneg %p88
        $region22: #{tpu_custom_call.1} parent=15 // pred_check_branch
          %164 = sbr.rel (%p162) target = $region24
        $region23: #{tpu_custom_call.1} parent=15 // pred_region
          %s165 = sand.u32 %s78, 1
          %s166 = scalar_lea.sflag [#allocation9], %s165
          %s167 = sand.u32 %s78, 1
          %s168 = smul.addr %s167, 32
          %s169 = scalar_lea.vmem [#allocation8], %s168
          %s170 = smul.u32 4, %s25
          %172 = vsyncadd %s166, 0
          %s173 = smul.addr %s170, 2
          %s174 = sadd.s32 %s26, %s173
          %s175 = smul.addr %s24, 8
          %s176 = sadd.s32 %s174, %s175
          %s177 = smul.addr %s176, 8
          %s178 = scalar_lea.hbm %s1, %s177
          %s179 = sshll.u32 %s178, 4
          %s180 = int_to_ptr.hbm [resolvable:$true] %s179
          %s181 = sshll.u32 %s169, 4
          %s182 = int_to_ptr.vmem [resolvable:$true] %s181
          %187 = dma.hbm_to_vmem [thread:$0]  %s180, 512, %s182, %s166, 256, 128, 8
        $region24: #{tpu_custom_call.1} parent=15 // pred_fallthru
          _
      $region16: #{tpu_custom_call.1} parent=5 // pred_fallthru
        _
      %p188 = scmp.le.s32.totalorder 1, %s17
      %p189 = scmp.lt.s32.totalorder %s17, 5
      %p190 = pnand %p188, %p189
      %p191 = pneg %p190
      // Predicated region
      $region25: #{tpu_custom_call.1} parent=5 // pred_check
        _
      $region26: #{tpu_custom_call.1} parent=5 // pred_check_branch
        %193 = sbr.rel (%p190) target = $region28
      $region27: #{tpu_custom_call.1} parent=5 // pred_region
        %s194 = ssub.s32 %s17, 1
        %s195 = sand.u32 %s51, 1
        %s196 = scalar_lea.sflag [#allocation6], %s195
        %s197 = sand.u32 %s51, 1
        %s198 = smul.addr %s197, 4
        %s199 = scalar_lea.vmem [#allocation5], %s198
        // Predicated region
        $region29: #{tpu_custom_call.1} parent=27 // pred_check
          %p200 = pneg %p64
        $region30: #{tpu_custom_call.1} parent=27 // pred_check_branch
          %202 = sbr.rel (%p200) target = $region32
        $region31: #{tpu_custom_call.1} parent=27 // pred_region
          %204 = dma.done %s196, 64
        $region32: #{tpu_custom_call.1} parent=27 // pred_fallthru
          _
        %s205 = sand.u32 %s81, 1
        %s206 = scalar_lea.sflag [#allocation9], %s205
        %s207 = sand.u32 %s81, 1
        %s208 = smul.addr %s207, 32
        %s209 = scalar_lea.vmem [#allocation8], %s208
        // Predicated region
        $region33: #{tpu_custom_call.1} parent=27 // pred_check
          %p210 = pneg %p94
        $region34: #{tpu_custom_call.1} parent=27 // pred_check_branch
          %212 = sbr.rel (%p210) target = $region36
        $region35: #{tpu_custom_call.1} parent=27 // pred_region
          %214 = dma.done %s206, 512
        $region36: #{tpu_custom_call.1} parent=27 // pred_fallthru
          _
        %s215 = sand.u32 %s51, 1
        %s216 = scalar_lea.sflag [#allocation6], %s215
        %s217 = sand.u32 %s51, 1
        %s218 = smul.addr %s217, 4
        %s219 = scalar_lea.vmem [#allocation5], %s218
        %p220 = pneg %p64
        %p221 = pneg %p61
        %s222 = sand.u32 %s81, 1
        %s223 = scalar_lea.sflag [#allocation9], %s222
        %s224 = sand.u32 %s81, 1
        %s225 = smul.addr %s224, 32
        %s226 = scalar_lea.vmem [#allocation8], %s225
        %p227 = pneg %p94
        %p228 = pneg %p91
        %p229 = pneg %p122
        %p230 = pneg %p119
        %s231 = sand.u32 %s109, 1
        %s232 = scalar_lea.sflag [#allocation7], %s231
        %s233 = sand.u32 %s109, 1
        %s234 = smul.addr %s233, 4
        %s235 = scalar_lea.vmem [#allocation10], %s234
        %s236 = smul.u32 4, %s28
        %p237 = scmp.eq.s32.totalorder %s29, 0
        // Predicated region
        $region37: #{tpu_custom_call.1} parent=27 // pred_check
          %p238 = pneg %p237
        $region38: #{tpu_custom_call.1} parent=27 // pred_check_branch
          %240 = sbr.rel (%p238) target = $region40
        $region39: #{tpu_custom_call.1} parent=27 // pred_region
          %vm241 = vcmask 3072
          %242 = vst.msk [vmem:[#allocation2] sm:$0xf] %vm241, -inf
          %243 = vst.msk [vmem:[#allocation3] sm:$0xf] %vm241, 0.0
          %vm244 = vcmask 257024
          %245 = vst.msk [vmem:[#allocation4] sm:$0xf] %vm244, 0.0
        $region40: #{tpu_custom_call.1} parent=27 // pred_fallthru
          _
        %v246 = vld [vmem:[%s199] sm:$0xf]
        %v247 = vld [vmem:[%s209] sm:$0xff]
        %v248 = vld [vmem:[%s209 + $0x8] sm:$0xff]
        %v249 = vld [vmem:[%s209 + $0x10] sm:$0xff]
        %v250 = vld [vmem:[%s209 + $0x18] sm:$0xff]
        %v251 = vld [vmem:[#allocation2] sm:$0xf]
        %vm252 = vcmask 1043456
        %v253 = vsel %vm252, %v246, -inf
        %254 = vmax.xlane.f32.xlu0 %v253
        %v255 = vpop.xlane.xlu0 %254
        %v256 = vmax.f32 %v251, %v255
        %v257 = vsub.f32 %v251, %v256
        %v258 = vmul.f32 %v257, 1.442695
        %v259 = vpow.pop %v258
        %261 = vset.pattern.permute.xlu0 0
        %262 = vperm.xlu0 %261, %v256
        %v263 = vpop.permute.xlu0 %262
        %v265 = vsub.f32 %v246, %v263
        %v266 = vmul.f32 %v265, 1.442695
        %v267 = vpow.pop %v266
        %v268 = vld [vmem:[#allocation3] sm:$0xf]
        %v269 = vmul.f32 %v259, %v268
        %v270 = vsel %vm252, %v267, 0.0
        %271 = vadd.xlane.f32.xlu0 %v270
        %v272 = vpop.xlane.xlu0 %271
        %v273 = vadd.f32 %v269, %v272
        %vm274 = vcmask 3072
        %275 = vst.msk [vmem:[#allocation3] sm:$0xf] %vm274, %v273
        %276 = vst.msk [vmem:[#allocation2] sm:$0xf] %vm274, %v256
        %277 = vmatpush.xpose.msra.mxu0 0.0
        %278 = vmatpush.xpose.msra.mxu0 0.0
        %279 = vmatpush.xpose.msra.mxu0 0.0
        %280 = vmatpush.xpose.msra.mxu0 0.0
        %281 = vmatpush.xpose.msra.mxu0 0.0
        %282 = vmatpush.xpose.msra.mxu0 0.0
        %283 = vmatpush.xpose.msra.mxu0 0.0
        %284 = vmatpush.xpose.msra.mxu0 0.0
        %285 = vmatpush.xpose.msra.mxu0 0.0
        %286 = vmatpush.xpose.msra.mxu0 0.0
        %287 = vmatpush.xpose.msra.mxu0 0.0
        %288 = vmatpush.xpose.msra.mxu0 0.0
        %289 = vmatpush.xpose.msra.mxu0 %v250
        %290 = vmatpush.xpose.msra.mxu0 %v249
        %291 = vmatpush.xpose.msra.mxu0 %v248
        %292 = vmatpush.xpose.msra.mxu0 %v247
        %293 = vmatmul.f32.gmra.mxu0 %v267
        %v294 = vpop.f32.mrf.mxu0
        %v295 = vadd.f32 0.0, %v294
        %296 = vdwg.mxu0
        %v297 = vld [vmem:[#allocation4] sm:$0xf]
        %299 = vset.pattern.permute.xlu0 0
        %300 = vperm.xlu0 %299, %v259
        %v301 = vpop.permute.xlu0 %300
        %v303 = vmul.f32 %v297, %v301
        %v304 = vadd.f32 %v303, %v295
        %vm305 = vcmask 257024
        %306 = vst.msk [vmem:[#allocation4] sm:$0xf] %vm305, %v304
        %p307 = scmp.eq.s32.totalorder %s29, 1
        // Predicated region
        $region41: #{tpu_custom_call.1} parent=27 // pred_check
          %p308 = pneg %p307
        $region42: #{tpu_custom_call.1} parent=27 // pred_check_branch
          %310 = sbr.rel (%p308) target = $region44
        $region43: #{tpu_custom_call.1} parent=27 // pred_region
          %v311 = vld [vmem:[#allocation4] sm:$0xf]
          %v312 = vld [vmem:[#allocation3] sm:$0xf]
          %v313 = vrcp.pop %v312
          %v314 = vmul.f32 %v312, %v313
          %v315 = vsub.f32 1.0, %v314
          %v316 = vmul.f32 %v313, %v315
          %v317 = vadd.f32 %v313, %v316
          %vm318 = vweird.f32 %v312
          %vm319 = vweird.f32 %v313
          %vm320 = vmor %vm318, %vm319
          %v321 = vsel %vm320, %v313, %v317
          %v322 = vand.u32 2147483647, %v312
          %vm323 = vcmp.eq.f32.partialorder %v322, 8.507059e+37
          %v324 = vand.u32 %v312, 2147483648
          %v325 = vor.u32 1.1754944e-38, %v324
          %v326 = vsel %vm323, %v325, %v321
          %v327 = vmul.f32 1.0, %v326
          %329 = vset.pattern.permute.xlu0 0
          %330 = vperm.xlu0 %329, %v327
          %v331 = vpop.permute.xlu0 %330
          %v333 = vmul.f32 %v311, %v331
          %334 = vst.msk [vmem:[%s235] sm:$0xf] %vm305, %v333
        $region44: #{tpu_custom_call.1} parent=27 // pred_fallthru
          _
        %s335 = sand.u32 %s109, 1
        %s336 = scalar_lea.sflag [#allocation7], %s335
        %s337 = sand.u32 %s109, 1
        %s338 = smul.addr %s337, 4
        %s339 = scalar_lea.vmem [#allocation10], %s338
        // Predicated region
        $region45: #{tpu_custom_call.1} parent=27 // pred_check
          %p340 = pneg %p119
        $region46: #{tpu_custom_call.1} parent=27 // pred_check_branch
          %342 = sbr.rel (%p340) target = $region48
        $region47: #{tpu_custom_call.1} parent=27 // pred_region
          %344 = vsyncadd %s336, 0
          %s345 = sadd.s32 %s28, %s27
          %s346 = smul.addr %s345, 4
          %s347 = scalar_lea.hbm %s2, %s346
          %s349 = sshll.u32 %s339, 4
          %s350 = int_to_ptr.vmem [resolvable:$true] %s349
          %s351 = sshll.u32 %s347, 4
          %s352 = int_to_ptr.hbm [resolvable:$true] %s351
          %354 = dma.vmem_to_hbm [thread:$0]  %s350, 64, %s352, %s336
        $region48: #{tpu_custom_call.1} parent=27 // pred_fallthru
          _
      $region28: #{tpu_custom_call.1} parent=5 // pred_fallthru
        _
      %p355 = scmp.le.s32.totalorder 2, %s17
      // Predicated region
      $region49: #{tpu_custom_call.1} parent=5 // pred_check
        %p356 = pneg %p355
      $region50: #{tpu_custom_call.1} parent=5 // pred_check_branch
        %358 = sbr.rel (%p356) target = $region52
      $region51: #{tpu_custom_call.1} parent=5 // pred_region
        %s359 = ssub.s32 %s17, 2
        // Predicated region
        $region53: #{tpu_custom_call.1} parent=51 // pred_check
          %p360 = pneg %p125
        $region54: #{tpu_custom_call.1} parent=51 // pred_check_branch
          %362 = sbr.rel (%p360) target = $region56
        $region55: #{tpu_custom_call.1} parent=51 // pred_region
          %s363 = sand.u32 %s110, 1
          %s364 = scalar_lea.sflag [#allocation7], %s363
          %s365 = sand.u32 %s110, 1
          %s366 = smul.addr %s365, 4
          %s367 = scalar_lea.vmem [#allocation10], %s366
          %369 = dma.done %s364, 64
        $region56: #{tpu_custom_call.1} parent=51 // pred_fallthru
          _
      $region52: #{tpu_custom_call.1} parent=5 // pred_fallthru
        _
    $region6: #{tpu_custom_call.1} parent=1 // loop_footer
      %s21 = sadd.s32 1, %s17
    $region7: #{tpu_custom_call.1} parent=1 // loop_footer_branch
      %16 = sbr.rel target = $region3
    $region8: #{tpu_custom_call.1} parent=1 // loop_exit
      _
    %370 = vsyncpa [#allocation6], 1
    %s371 = scalar_lea.sflag [#allocation6], 1
    %372 = vsyncpa %s371, 1
    %373 = vsyncpa [#allocation9], 1
    %s374 = scalar_lea.sflag [#allocation9], 1
    %375 = vsyncpa %s374, 1
    %376 = vsyncpa [#allocation7], 1
    %s377 = scalar_lea.sflag [#allocation7], 1
    %378 = vsyncpa %s377, 1

</llo_original>
